<compile_context>
chip_gen: v5e
topology: v5e:2x2
jax: 0.10.0
libtpu: 0.0.40
codegen_flags: <defaults>
</compile_context>

<pallas_src>
import math

import jax
import jax.numpy as jnp
from jax.experimental import pallas as pl
from jax.experimental.pallas import tpu as pltpu


_LANE = 128
_MAX_TILE_M = 2048     # stage-2 dst-row tile cap
_MAX_TILE_K = 1024     # stage-2 reduction (src-concat) tile cap
_MAX_TILE_S1 = 512     # stage-1 src-row / fin tile cap


def _round_up(x, m):
    return (x + m - 1) // m * m


def _vmem_limit_bytes():
    """~75% of physical VMEM: 96 MiB on v5e/v6e (128 MiB), 48 MiB on v7x (64 MiB)."""
    phys = 64 * 1024 * 1024
    try:
        info = pltpu.get_tpu_info()
        phys = int(getattr(info, "vmem_capacity_bytes", phys)) or phys
    except Exception:
        pass
    return int(min(100 * 1024 * 1024, max(32 * 1024 * 1024, (phys * 3) // 4)))


def _largest_divisor_tile(n, cap):
    """Largest multiple of 128 that divides n (itself a multiple of 128), <= cap."""
    units = n // _LANE
    for d in range(max(1, min(cap, n) // _LANE), 0, -1):
        if units % d == 0:
            return d * _LANE
    return _LANE


def _padded_tile(n, cap, max_waste_frac=0.125):
    """(tile, n_padded): largest lane-aligned tile <= cap with bounded pad waste."""
    n = _round_up(max(int(n), 1), _LANE)
    hi = max(_LANE, (min(cap, n) // _LANE) * _LANE)
    for t in range(hi, _LANE - 1, -_LANE):
        padded = _round_up(n, t)
        if padded - n <= max_waste_frac * n:
            return t, padded
    return _LANE, n


def _pad2d(x, rows, cols, dtype):
    r, c = x.shape
    return jnp.pad(x.astype(dtype), ((0, rows - r), (0, cols - c)))


# ----------------------------------------------------------------------------
# Stage 1: per-source-type transform  H[r] = X @ W[r]  (relations sharing X)
# ----------------------------------------------------------------------------
def _transform_kernel(x_ref, w_ref, h_ref, acc_ref):
    k = pl.program_id(2)

    @pl.when(k == 0)
    def _():
        acc_ref[...] = jnp.zeros_like(acc_ref)

    acc_ref[...] += jnp.dot(x_ref[...], w_ref[...],
                            preferred_element_type=jnp.float32)

    @pl.when(k == pl.num_programs(2) - 1)
    def _():
        h_ref[...] = acc_ref[...].astype(h_ref.dtype)


def rgcn_transform(x_pad, w_stack, *, vmem_limit):
    """H[r] = x_pad @ w_stack[r] for every relation r of one source type.

    x_pad:   (N_pad, Fin_p)        bf16 padded node features of ONE source type
    w_stack: (R_t, Fin_p, Fout_p)  bf16 per-relation weights
    returns: (R_t, N_pad, Fout_p)  bf16
    """
    n_pad, fin_p = x_pad.shape
    num_rel, _, fout_p = w_stack.shape
    cap = 256 if fout_p >= 2048 else _MAX_TILE_S1   # keep VMEM bounded for wide Fout
    tile_src = _largest_divisor_tile(n_pad, cap)
    tile_fin = _largest_divisor_tile(fin_p, cap)
    grid = (n_pad // tile_src, num_rel, fin_p // tile_fin)

    return pl.pallas_call(
        _transform_kernel,
        out_shape=jax.ShapeDtypeStruct((num_rel, n_pad, fout_p), jnp.bfloat16),
        grid=grid,
        in_specs=[
            # X spec ignores the relation axis -> consecutive relations of the same
            # source type keep the same X block index and Pallas skips the re-DMA.
            pl.BlockSpec((tile_src, tile_fin), lambda s, r, k: (s, k)),
            pl.BlockSpec((None, tile_fin, fout_p), lambda s, r, k: (r, k, 0)),
        ],
        out_specs=pl.BlockSpec((None, tile_src, fout_p), lambda s, r, k: (r, s, 0)),
        scratch_shapes=[pltpu.VMEM((tile_src, fout_p), jnp.float32)],
        compiler_params=pltpu.CompilerParams(
            dimension_semantics=("parallel", "parallel", "arbitrary"),
            vmem_limit_bytes=vmem_limit,
        ),
    )(x_pad, w_stack)


# ----------------------------------------------------------------------------
# Stage 2: per-destination-type aggregation  out = relu(A_cat @ H_cat)
#   The relation sum is fused into the K axis by concatenation; A is int8 in HBM
#   and cast to bf16 on the VPU right before the MXU dot (kernel is DMA-bound).
# ----------------------------------------------------------------------------
def _aggregate_kernel(a_ref, h_ref, o_ref):
    k = pl.program_id(1)
    part = jnp.dot(a_ref[...].astype(jnp.bfloat16), h_ref[...],
                   preferred_element_type=jnp.float32)

    @pl.when(k == 0)
    def _():
        o_ref[...] = part

    @pl.when(k > 0)
    def _():
        o_ref[...] += part

    @pl.when(k == pl.num_programs(1) - 1)
    def _():
        # ReLU epilogue; fout_p is a multiple of 128 -> dense vst.
        o_ref[...] = jnp.maximum(o_ref[...], 0.0)


def _stage2_tiles(n_dst, k_total, fout_p, vmem_limit):
    budget = int(vmem_limit * 0.6)   # headroom for Mosaic internals / cast copies
    cap_m, cap_k = _MAX_TILE_M, _MAX_TILE_K
    while True:
        tile_m, m_pad = _padded_tile(n_dst, cap_m)
        tile_k, k_pad = _padded_tile(k_total, cap_k)
        # int8 A (double-buffered) + in-kernel bf16 A copy + bf16 H (double-buffered)
        # + resident f32 output block (double-counted for safety).
        est = (2 * tile_m * tile_k + tile_m * tile_k * 2
               + 2 * tile_k * fout_p * 2 + 2 * tile_m * fout_p * 4)
        if est <= budget or (tile_m == _LANE and tile_k == _LANE):
            break
        if tile_m >= tile_k:
            cap_m = max(_LANE, tile_m // 2)
        else:
            cap_k = max(_LANE, tile_k // 2)
    # v7x has two TensorCores: keep >=2 tiles on the "parallel" dst axis if possible.
    if m_pad // tile_m < 2 and m_pad >= 2 * _LANE:
        tile_m, m_pad = _padded_tile(n_dst, max(_LANE, (m_pad // 2) // _LANE * _LANE))
    return tile_m, m_pad, tile_k, k_pad


def rgcn_aggregate(a_cat, h_cat, *, tile_m, tile_k, vmem_limit):
    """relu(a_cat @ h_cat); a_cat int8 (M_pad, K_pad), h_cat bf16 (K_pad, Fout_p)."""
    m_pad, k_pad = a_cat.shape
    _, fout_p = h_cat.shape
    grid = (m_pad // tile_m, k_pad // tile_k)
    return pl.pallas_call(
        _aggregate_kernel,
        out_shape=jax.ShapeDtypeStruct((m_pad, fout_p), jnp.float32),
        grid=grid,
        in_specs=[
            # TODO(synk): set pipeline_mode=pl.Buffered(3) on the A spec if an xprof
            # trace shows exposed DMA at grid-step boundaries.
            pl.BlockSpec((tile_m, tile_k), lambda i, k: (i, k)),
            pl.BlockSpec((tile_k, fout_p), lambda i, k: (k, 0)),
        ],
        out_specs=pl.BlockSpec((tile_m, fout_p), lambda i, k: (i, 0)),
        compiler_params=pltpu.CompilerParams(
            dimension_semantics=("parallel", "arbitrary"),
            vmem_limit_bytes=vmem_limit,
        ),
    )(a_cat, h_cat)


# ----------------------------------------------------------------------------
# Python wrapper mirroring RelGraphConvLayer.forward over a hetero graph.
# ----------------------------------------------------------------------------
def rel_graph_conv_layer(adjs, x_dict, weights, *, param_dtype=jnp.bfloat16,
                         adj_dtype=jnp.int8):
    """adjs: {(stype, etype, dtype): (N_dst, N_src) dense 0/1 float array}
       x_dict: {ntype: (N, in_feat)}
       weights: {etype: (in_feat, out_feat)}
       returns {ntype: (N, out_feat) float32}

    adj_dtype=int8 is lossless for 0/1 adjacencies and halves the HBM traffic of
    the bandwidth-bound aggregation; pass jnp.bfloat16/float32 for weighted or
    normalized adjacencies.  param_dtype=bf16 keeps X/W/H in bf16 with f32 MXU
    accumulation (~0.5% rel error vs f32 PyTorch); pass jnp.float32 for exactness.
    """
    ntypes = list(x_dict.keys())
    type_order = {nt: i for i, nt in enumerate(ntypes)}
    rels = list(adjs.keys())

    f_in = next(iter(x_dict.values())).shape[1]
    f_out = next(iter(weights.values())).shape[1]
    fin_p = _round_up(f_in, _LANE)
    fout_p = _round_up(f_out, _LANE)

    n_nodes = {nt: int(x_dict[nt].shape[0]) for nt in ntypes}
    # Per-type padding to multiples of 128 (NOT to a global max, NOT to tile size).
    n_pad = {nt: _round_up(max(n_nodes[nt], 1), _LANE) for nt in ntypes}

    vmem_limit = _vmem_limit_bytes()

    # --- Stage 1: H[r] = X[stype(r)] @ W[etype(r)], grouped by source type so X is
    #     streamed once per (src tile, fin tile) regardless of the relation count.
    h_by_rel = {}
    for st in ntypes:
        group = [key for key in rels if key[0] == st]
        if not group:
            continue
        x_p = _pad2d(x_dict[st], n_pad[st], fin_p, param_dtype)
        w_stack = jnp.stack([_pad2d(weights[etype], fin_p, fout_p, param_dtype)
                             for (_, etype, _) in group])
        h_stack = rgcn_transform(x_p, w_stack, vmem_limit=vmem_limit)
        for i, key in enumerate(group):
            h_by_rel[key] = h_stack[i]

    # --- Stage 2: per destination type, the relation sum becomes a K-axis concat:
    #     out = relu( [A_r1 | A_r2 | ...] @ [H_r1; H_r2; ...] ), one wide matmul.
    h_dict = {}
    for nt in ntypes:
        group = [key for key in rels if key[2] == nt]
        n_dst = n_nodes[nt]
        if not group:
            # TODO(synk): PyTorch hits th.relu(0) (a python int) for node types with
            # no incoming relations; emit an all-zero feature block instead.
            h_dict[nt] = jnp.zeros((n_dst, f_out), jnp.float32)
            continue
        group = sorted(group, key=lambda key: type_order[key[0]])
        k_total = sum(n_pad[key[0]] for key in group)
        tile_m, m_pad, tile_k, k_pad = _stage2_tiles(n_pad[nt], k_total,
                                                     fout_p, vmem_limit)
        a_cat = jnp.concatenate(
            [_pad2d(adjs[key], n_pad[nt], n_pad[key[0]], adj_dtype) for key in group],
            axis=1)
        h_cat = jnp.concatenate([h_by_rel[key] for key in group], axis=0)
        # Align to the chosen tiles (bounded per-type padding; zero A rows/cols
        # contribute nothing and padded dst rows are sliced off below).
        a_cat = jnp.pad(a_cat, ((0, m_pad - a_cat.shape[0]),
                                (0, k_pad - a_cat.shape[1])))
        h_cat = jnp.pad(h_cat, ((0, k_pad - h_cat.shape[0]), (0, 0)))
        out_pad = rgcn_aggregate(a_cat, h_cat, tile_m=tile_m, tile_k=tile_k,
                                 vmem_limit=vmem_limit)
        h_dict[nt] = out_pad[:n_dst, :f_out]
    return h_dict


def _xavier_uniform(key, shape, gain):
    fan_in, fan_out = shape
    bound = gain * math.sqrt(6.0 / (fan_in + fan_out))
    return jax.random.uniform(key, shape, jnp.float32, minval=-bound, maxval=bound)


if __name__ == "__main__":
    key = jax.random.PRNGKey(0)

    in_feat, out_feat = 32, 32
    n_user, n_item = 16, 16
    rel_names = ["follows", "buys", "bought-by"]
    canonical_etypes = [
        ("user", "follows", "user"),
        ("user", "buys", "item"),
        ("item", "bought-by", "user"),
    ]

    k_feat_u, k_feat_i, k_adj, *k_ws = jax.random.split(key, 3 + len(rel_names))

    # node features
    x_dict = {
        "user": jax.random.normal(k_feat_u, (n_user, in_feat), jnp.float32),
        "item": jax.random.normal(k_feat_i, (n_item, in_feat), jnp.float32),
    }
    n_nodes = {"user": n_user, "item": n_item}

    # dense 0/1 adjacency per relation (N_dst, N_src)
    adjs = {}
    adj_keys = jax.random.split(k_adj, len(canonical_etypes))
    for ak, (stype, etype, dtype) in zip(adj_keys, canonical_etypes):
        a = (jax.random.uniform(ak, (n_nodes[dtype], n_nodes[stype])) < 0.25)
        adjs[(stype, etype, dtype)] = a.astype(jnp.float32)

    # per-relation weights, xavier_uniform with relu gain (sqrt(2))
    gain = math.sqrt(2.0)
    weights = {
        rel: _xavier_uniform(kw, (in_feat, out_feat), gain)
        for rel, kw in zip(rel_names, k_ws)
    }

    # run the Pallas implementation
    h_dict = rel_graph_conv_layer(adjs, x_dict, weights)
    h_dict = {k: jax.block_until_ready(v) for k, v in h_dict.items()}

    # pure-JAX f32 reference for correctness
    ref = {nt: jnp.zeros((n_nodes[nt], out_feat), jnp.float32) for nt in x_dict}
    for (stype, etype, dtype), a in adjs.items():
        ref[dtype] = ref[dtype] + a @ (x_dict[stype] @ weights[etype])
    ref = {nt: jnp.maximum(v, 0.0) for nt, v in ref.items()}

    for nt in h_dict:
        assert h_dict[nt].shape == (n_nodes[nt], out_feat)
        # bf16 X/W/H (int8 A is exact) -> ~0.5% relative error vs the f32 reference.
        assert jnp.allclose(h_dict[nt], ref[nt], atol=5e-2, rtol=5e-2), nt

    print("KERNEL_OK")
</pallas_src>

<mosaic_0001>
module attributes {stable_mosaic.version = 11 : i64} {
  func.func @_transform_kernel(%arg0: i32, %arg1: i32, %arg2: i32, %arg3: memref<128x128xbf16, #tpu.memory_space<vmem>>, %arg4: memref<1x128x128xbf16, #tpu.memory_space<vmem>>, %arg5: memref<1x128x128xbf16, #tpu.memory_space<vmem>>, %arg6: memref<128x128xf32, #tpu.memory_space<vmem>>) attributes {dimension_semantics = [#tpu.dimension_semantics<parallel>, #tpu.dimension_semantics<parallel>, #tpu.dimension_semantics<arbitrary>], iteration_bounds = array<i64: 1, 2, 1>, scalar_prefetch = 0 : i64, scratch_operands = 1 : i64, tpu.core_type = #tpu.core_type<tc>, window_params = [{transform_indices = @transform_0, window_bounds = array<i64: 128, 128>}, {transform_indices = @transform_1, window_bounds = array<i64: 1, 128, 128>}, {transform_indices = @transform_2, window_bounds = array<i64: 1, 128, 128>}]} {
    %c0_i32 = arith.constant 0 : i32
    %0 = arith.cmpi eq, %arg2, %c0_i32 : i32
    %1 = arith.extui %0 : i1 to i32
    %c0_i32_0 = arith.constant 0 : i32
    %2 = arith.cmpi ne, %1, %c0_i32_0 : i32
    scf.if %2 {
      %cst_11 = arith.constant 0.000000e+00 : f32
      %13 = vector.broadcast %cst_11 : f32 to vector<128x128xf32>
      %c0_12 = arith.constant 0 : index
      %c0_13 = arith.constant 0 : index
      %14 = vector.load %arg6[%c0_12, %c0_13] : memref<128x128xf32, #tpu.memory_space<vmem>>, vector<128x128xf32>
      tpu.vector_store %arg6[%c0_12, %c0_13], %13 {strides = array<i32>} : memref<128x128xf32, #tpu.memory_space<vmem>>, vector<128x128xf32>,
    } else {
    }
    %c0 = arith.constant 0 : index
    %c0_1 = arith.constant 0 : index
    %3 = vector.load %arg6[%c0, %c0_1] : memref<128x128xf32, #tpu.memory_space<vmem>>, vector<128x128xf32>
    %c0_2 = arith.constant 0 : index
    %c0_3 = arith.constant 0 : index
    %4 = vector.load %arg3[%c0_2, %c0_3] : memref<128x128xbf16, #tpu.memory_space<vmem>>, vector<128x128xbf16>
    %c0_4 = arith.constant 0 : index
    %c0_5 = arith.constant 0 : index
    %c0_6 = arith.constant 0 : index
    %5 = vector.load %arg4[%c0_4, %c0_5, %c0_6] : memref<1x128x128xbf16, #tpu.memory_space<vmem>>, vector<1x128x128xbf16>
    %6 = vector.shape_cast %5 : vector<1x128x128xbf16> to vector<128x128xbf16>
    %cst = arith.constant dense<0.000000e+00> : vector<128x128xf32>
    %7 = tpu.matmul %4, %6, %cst {dimension_numbers = #tpu.dot_dimension_numbers<[1], [0], [0], [1], [0, 0, 1, 1], [], []>} : vector<128x128xbf16>, vector<128x128xbf16>, vector<128x128xf32> -> vector<128x128xf32>
    %8 = arith.addf %3, %7 : vector<128x128xf32>
    %c0_7 = arith.constant 0 : index
    %c0_8 = arith.constant 0 : index
    %9 = vector.load %arg6[%c0_7, %c0_8] : memref<128x128xf32, #tpu.memory_space<vmem>>, vector<128x128xf32>
    tpu.vector_store %arg6[%c0_7, %c0_8], %8 {strides = array<i32>} : memref<128x128xf32, #tpu.memory_space<vmem>>, vector<128x128xf32>,
    %c0_i32_9 = arith.constant 0 : i32
    %10 = arith.cmpi eq, %arg2, %c0_i32_9 : i32
    %11 = arith.extui %10 : i1 to i32
    %c0_i32_10 = arith.constant 0 : i32
    %12 = arith.cmpi ne, %11, %c0_i32_10 : i32
    scf.if %12 {
      %c0_11 = arith.constant 0 : index
      %c0_12 = arith.constant 0 : index
      %13 = vector.load %arg6[%c0_11, %c0_12] : memref<128x128xf32, #tpu.memory_space<vmem>>, vector<128x128xf32>
      %14 = arith.truncf %13 : vector<128x128xf32> to vector<128x128xbf16>
      %c0_13 = arith.constant 0 : index
      %c0_14 = arith.constant 0 : index
      %c0_15 = arith.constant 0 : index
      %15 = vector.load %arg5[%c0_13, %c0_14, %c0_15] : memref<1x128x128xbf16, #tpu.memory_space<vmem>>, vector<1x128x128xbf16>
      %16 = vector.shape_cast %15 : vector<1x128x128xbf16> to vector<128x128xbf16>
      %17 = vector.shape_cast %14 : vector<128x128xbf16> to vector<1x128x128xbf16>
      tpu.vector_store %arg5[%c0_13, %c0_14, %c0_15], %17 {strides = array<i32>} : memref<1x128x128xbf16, #tpu.memory_space<vmem>>, vector<1x128x128xbf16>,
    } else {
    }
    return
  }
  func.func @transform_0(%arg0: i32, %arg1: i32, %arg2: i32) -> (i32, i32) {
    %c0_i32 = arith.constant 0 : i32
    return %arg0, %arg2 : i32, i32
  }
  func.func @transform_1(%arg0: i32, %arg1: i32, %arg2: i32) -> (i32, i32, i32) {
    %c0_i32 = arith.constant 0 : i32
    %c0_i32_0 = arith.constant 0 : i32
    return %arg1, %arg2, %c0_i32 : i32, i32, i32
  }
  func.func @transform_2(%arg0: i32, %arg1: i32, %arg2: i32) -> (i32, i32, i32) {
    %c0_i32 = arith.constant 0 : i32
    %c0_i32_0 = arith.constant 0 : i32
    return %arg1, %arg0, %c0_i32 : i32, i32, i32
  }
}

</mosaic_0001>

<llo_original>
// kernel: tpu_custom_call.1
$region0: #{tpu_custom_call.1}
  #allocation0 [shape = 'u32[]', space=smem, size = 0x4, offset = 0x4, fixed_abs, tag = 'smem constant byte address 0x4 - core index']
  #allocation1 [shape = 'u32[72,128]{1,0:T(1,128)}', space=vmem, size = 0x9000, scoped, tag = 'internal scratch']
  #allocation2 [shape = 'f32[128,128]{1,0:T(8,128)}', space=vmem, size = 0x10000, scoped, tag = 'scratch operand']
  %s0 = inlined_call_operand.hbm [shape: bf16[128,128], index: 0, kind: input, shape index: {}]
  %s1 = inlined_call_operand.hbm [shape: bf16[2,128,128], index: 1, kind: input, shape index: {}]
  %s2 = inlined_call_operand.hbm [shape: bf16[2,128,128], index: 2, kind: output, shape index: {}]
  %s3 = sld [smem:[#allocation0]]
  $region57: #{tpu_custom_call.1} parent=0
    _
  %s5 = ssub.s32 1, %s3
  %s6 = scalar_select 0, %s5, %s3
  $region1: #{tpu_custom_call.1} parent=0
    #allocation3 [shape = 'u8[32768]{0}', space=vmem, size = 0x8000, scoped, tag = 'input window, operand 0, single buffered']
    #allocation4 [shape = 's32[2]{0}', space=sflag, size = 0x8, scoped, tag = 'scoped memory for tpu_custom_call.1']
    #allocation5 [shape = 's32[2]{0}', space=sflag, size = 0x8, scoped, tag = 'scoped memory for tpu_custom_call.1']
    #allocation6 [shape = 'u8[65536]{0}', space=vmem, size = 0x10000, scoped, tag = 'input window, operand 1']
    #allocation7 [shape = 's32[2]{0}', space=sflag, size = 0x8, scoped, tag = 'scoped memory for tpu_custom_call.1']
    #allocation8 [shape = 'u8[65536]{0}', space=vmem, size = 0x10000, scoped, tag = 'output window, operand 0']
    %7 = vsyncpa [#allocation4], 0
    %8 = vsyncpa [#allocation7], 0
    %s9 = scalar_lea.sflag [#allocation7], 1
    %10 = vsyncpa %s9, 0
    %11 = vsyncpa [#allocation5], 0
    %s12 = scalar_lea.sflag [#allocation5], 1
    %13 = vsyncpa %s12, 0
    loop: start=0, step=1, limit=4
    $region2: #{tpu_custom_call.1} parent=1 // loop_pre_header
      _
    $region3: #{tpu_custom_call.1} parent=1 // loop_header
      %s15 = sphi 0, %s19
      %p16 = scmp.ge.s32.totalorder %s15, 4
      %s22 = sphi 0, %s41
      %s23 = sphi 0, %s37
      %s24 = sphi 0, %s33
      %s25 = sphi 0, %s22
      %s26 = sphi 0, %s23
      %s27 = sphi 0, %s24
      %s28 = sphi 0, %s25
      %s29 = sphi 0, %s26
      %s30 = sphi 0, %s27
      %s46 = sphi 0, %s48
      %s49 = sphi 0, %s46
      %s50 = sphi 0, %s49
      %s66 = sphi 0, %s50
      %s74 = sphi 0, %s76
      %s77 = sphi 0, %s74
      %s78 = sphi 0, %s77
      %s94 = sphi 0, %s78
      %s102 = sphi 0, %s104
      %s105 = sphi 0, %s102
      %s106 = sphi 0, %s105
      %s122 = sphi 0, %s106
    $region4: #{tpu_custom_call.1} parent=1 // loop_header_branch
      %18 = sbr.rel (%p16) target = $region8
    $region5: #{tpu_custom_call.1} parent=1 // loop_body
      %s20 = ssub.s32 %s15, 1
      %s21 = ssub.s32 %s15, 2
      %s31 = sadd.s32 1, %s24
      %p32 = scmp.ge.s32.totalorder %s31, 1
      %s33 = scalar_select %p32, 0, %s31
      %s34 = sadd.s32 1, %s23
      %s35 = scalar_select %p32, %s34, %s23
      %p36 = scmp.ge.s32.totalorder %s35, 2
      %s37 = scalar_select %p36, 0, %s35
      %s38 = sadd.s32 1, %s22
      %s39 = scalar_select %p36, %s38, %s22
      %p40 = scmp.ge.s32.totalorder %s39, 1
      %s41 = scalar_select %p40, 0, %s39
      %s42 = ssub.s32 %s22, %s41
      %s43 = ssub.s32 %s24, %s33
      %s44 = sor.u32 %s42, %s43
      %p45 = scmp.eq.s32.totalorder %s44, 0
      %s47 = sadd.s32 %s46, 1
      %s48 = scalar_select %p45, %s46, %s47
      %p51 = pneg %p45
      %p52 = scmp.eq.s32.totalorder %s15, 1
      %p53 = por %p51, %p52
      %p54 = scmp.ne.s32.totalorder %s46, %s49
      %p55 = scmp.eq.s32.totalorder %s15, 0
      %p56 = por %p54, %p55
      %p57 = scmp.ne.s32.totalorder %s46, %s49
      %p58 = scmp.eq.s32.totalorder %s20, 1
      %p59 = por %p57, %p58
      %p60 = scmp.ne.s32.totalorder %s49, %s50
      %p61 = scmp.eq.s32.totalorder %s20, 0
      %p62 = por %p60, %p61
      %p63 = scmp.ne.s32.totalorder %s49, %s50
      %p64 = scmp.eq.s32.totalorder %s21, 1
      %p65 = por %p63, %p64
      %p67 = scmp.ne.s32.totalorder %s50, %s66
      %p68 = scmp.eq.s32.totalorder %s21, 0
      %p69 = por %p67, %p68
      %s70 = ssub.s32 %s23, %s37
      %s71 = ssub.s32 %s24, %s33
      %s72 = sor.u32 %s70, %s71
      %p73 = scmp.eq.s32.totalorder %s72, 0
      %s75 = sadd.s32 %s74, 1
      %s76 = scalar_select %p73, %s74, %s75
      %p79 = pneg %p73
      %p80 = scmp.eq.s32.totalorder %s15, 1
      %p81 = por %p79, %p80
      %p82 = scmp.ne.s32.totalorder %s74, %s77
      %p83 = scmp.eq.s32.totalorder %s15, 0
      %p84 = por %p82, %p83
      %p85 = scmp.ne.s32.totalorder %s74, %s77
      %p86 = scmp.eq.s32.totalorder %s20, 1
      %p87 = por %p85, %p86
      %p88 = scmp.ne.s32.totalorder %s77, %s78
      %p89 = scmp.eq.s32.totalorder %s20, 0
      %p90 = por %p88, %p89
      %p91 = scmp.ne.s32.totalorder %s77, %s78
      %p92 = scmp.eq.s32.totalorder %s21, 1
      %p93 = por %p91, %p92
      %p95 = scmp.ne.s32.totalorder %s78, %s94
      %p96 = scmp.eq.s32.totalorder %s21, 0
      %p97 = por %p95, %p96
      %s98 = ssub.s32 %s23, %s37
      %s99 = ssub.s32 %s22, %s41
      %s100 = sor.u32 %s98, %s99
      %p101 = scmp.eq.s32.totalorder %s100, 0
      %s103 = sadd.s32 %s102, 1
      %s104 = scalar_select %p101, %s102, %s103
      %p107 = pneg %p101
      %p108 = scmp.eq.s32.totalorder %s15, 1
      %p109 = por %p107, %p108
      %p110 = scmp.ne.s32.totalorder %s102, %s105
      %p111 = scmp.eq.s32.totalorder %s15, 0
      %p112 = por %p110, %p111
      %p113 = scmp.ne.s32.totalorder %s102, %s105
      %p114 = scmp.eq.s32.totalorder %s20, 1
      %p115 = por %p113, %p114
      %p116 = scmp.ne.s32.totalorder %s105, %s106
      %p117 = scmp.eq.s32.totalorder %s20, 0
      %p118 = por %p116, %p117
      %p119 = scmp.ne.s32.totalorder %s105, %s106
      %p120 = scmp.eq.s32.totalorder %s21, 1
      %p121 = por %p119, %p120
      %p123 = scmp.ne.s32.totalorder %s106, %s122
      %p124 = scmp.eq.s32.totalorder %s21, 0
      %p125 = por %p123, %p124
      %p126 = scmp.le.s32.totalorder 1, %s15
      %p127 = scmp.lt.s32.totalorder %s15, 3
      %p128 = pnand %p126, %p127
      %p129 = pneg %p128
      // Predicated region
      $region9: #{tpu_custom_call.1} parent=5 // pred_check
        _
      $region10: #{tpu_custom_call.1} parent=5 // pred_check_branch
        %131 = sbr.rel (%p128) target = $region12
      $region11: #{tpu_custom_call.1} parent=5 // pred_region
        %s132 = ssub.s32 %s15, 1
        // Predicated region
        $region13: #{tpu_custom_call.1} parent=11 // pred_check
          %p133 = pneg %p62
        $region14: #{tpu_custom_call.1} parent=11 // pred_check_branch
          %135 = sbr.rel (%p133) target = $region16
        $region15: #{tpu_custom_call.1} parent=11 // pred_region
          %s136 = smul.u32 16, %s25
          %138 = vsyncadd [#allocation4], 0
          %s139 = sadd.s32 %s27, %s136
          %s140 = smul.addr %s139, 4
          %s141 = scalar_lea.hbm %s0, %s140
          %s142 = sshll.u32 %s141, 4
          %s143 = int_to_ptr.hbm [resolvable:$true] %s142
          %s144 = sshll.u32 [#allocation3], 4
          %s145 = int_to_ptr.vmem [resolvable:$true] %s144
          %150 = dma.hbm_to_vmem [thread:$0]  %s143, 1024, %s145, [#allocation4], 64, 64, 4
        $region16: #{tpu_custom_call.1} parent=11 // pred_fallthru
          _
      $region12: #{tpu_custom_call.1} parent=5 // pred_fallthru
        _
      %p151 = scmp.lt.s32.totalorder %s15, 2
      // Predicated region
      $region17: #{tpu_custom_call.1} parent=5 // pred_check
        %p152 = pneg %p151
      $region18: #{tpu_custom_call.1} parent=5 // pred_check_branch
        %154 = sbr.rel (%p152) target = $region20
      $region19: #{tpu_custom_call.1} parent=5 // pred_region
        // Predicated region
        $region21: #{tpu_custom_call.1} parent=19 // pred_check
          %p155 = pneg %p84
        $region22: #{tpu_custom_call.1} parent=19 // pred_check_branch
          %157 = sbr.rel (%p155) target = $region24
        $region23: #{tpu_custom_call.1} parent=19 // pred_region
          %s158 = sand.u32 %s74, 1
          %s159 = scalar_lea.sflag [#allocation7], %s158
          %s160 = sand.u32 %s74, 1
          %s161 = smul.addr %s160, 64
          %s162 = scalar_lea.vmem [#allocation6], %s161
          %s163 = smul.u32 16, %s24
          %165 = vsyncadd %s159, 0
          %s166 = smul.addr %s23, 16
          %s167 = sadd.s32 %s163, %s166
          %s168 = smul.addr %s167, 4
          %s169 = scalar_lea.hbm %s1, %s168
          %s170 = sshll.u32 %s169, 4
          %s171 = int_to_ptr.hbm [resolvable:$true] %s170
          %s172 = sshll.u32 %s162, 4
          %s173 = int_to_ptr.vmem [resolvable:$true] %s172
          %178 = dma.hbm_to_vmem [thread:$0]  %s171, 1024, %s173, %s159, 64, 64, 4
        $region24: #{tpu_custom_call.1} parent=19 // pred_fallthru
          _
      $region20: #{tpu_custom_call.1} parent=5 // pred_fallthru
        _
      %p179 = scmp.le.s32.totalorder 1, %s15
      %p180 = scmp.lt.s32.totalorder %s15, 3
      %p181 = pnand %p179, %p180
      %p182 = pneg %p181
      // Predicated region
      $region25: #{tpu_custom_call.1} parent=5 // pred_check
        _
      $region26: #{tpu_custom_call.1} parent=5 // pred_check_branch
        %184 = sbr.rel (%p181) target = $region28
      $region27: #{tpu_custom_call.1} parent=5 // pred_region
        %s185 = ssub.s32 %s15, 1
        // Predicated region
        $region29: #{tpu_custom_call.1} parent=27 // pred_check
          %p186 = pneg %p62
        $region30: #{tpu_custom_call.1} parent=27 // pred_check_branch
          %188 = sbr.rel (%p186) target = $region32
        $region31: #{tpu_custom_call.1} parent=27 // pred_region
          %190 = dma.done [#allocation4], 1024
        $region32: #{tpu_custom_call.1} parent=27 // pred_fallthru
          _
        %s191 = sand.u32 %s77, 1
        %s192 = scalar_lea.sflag [#allocation7], %s191
        %s193 = sand.u32 %s77, 1
        %s194 = smul.addr %s193, 64
        %s195 = scalar_lea.vmem [#allocation6], %s194
        // Predicated region
        $region33: #{tpu_custom_call.1} parent=27 // pred_check
          %p196 = pneg %p90
        $region34: #{tpu_custom_call.1} parent=27 // pred_check_branch
          %198 = sbr.rel (%p196) target = $region36
        $region35: #{tpu_custom_call.1} parent=27 // pred_region
          %200 = dma.done %s192, 1024
        $region36: #{tpu_custom_call.1} parent=27 // pred_fallthru
          _
        %p201 = pneg %p62
        %p202 = pneg %p59
        %s203 = sand.u32 %s77, 1
        %s204 = scalar_lea.sflag [#allocation7], %s203
        %s205 = sand.u32 %s77, 1
        %s206 = smul.addr %s205, 64
        %s207 = scalar_lea.vmem [#allocation6], %s206
        %p208 = pneg %p90
        %p209 = pneg %p87
        %p210 = pneg %p118
        %p211 = pneg %p115
        %s212 = sand.u32 %s105, 1
        %s213 = scalar_lea.sflag [#allocation5], %s212
        %s214 = sand.u32 %s105, 1
        %s215 = smul.addr %s214, 64
        %s216 = scalar_lea.vmem [#allocation8], %s215
        %s217 = smul.u32 16, %s25
        %s218 = smul.u32 16, %s27
        %s219 = smul.u32 16, %s25
        %p220 = scmp.eq.s32.totalorder %s27, 0
        // Predicated region
        $region37: #{tpu_custom_call.1} parent=27 // pred_check
          %p221 = pneg %p220
        $region38: #{tpu_custom_call.1} parent=27 // pred_check_branch
          %223 = sbr.rel (%p221) target = $region40
        $region39: #{tpu_custom_call.1} parent=27 // pred_region
          %224 = vst [vmem:[#allocation2] sm:$0xff] 0.0
          %225 = vst [vmem:[#allocation2 + $0x8] sm:$0xff] 0.0
          %226 = vst [vmem:[#allocation2 + $0x10] sm:$0xff] 0.0
          %227 = vst [vmem:[#allocation2 + $0x18] sm:$0xff] 0.0
          %228 = vst [vmem:[#allocation2 + $0x20] sm:$0xff] 0.0
          %229 = vst [vmem:[#allocation2 + $0x28] sm:$0xff] 0.0
          %230 = vst [vmem:[#allocation2 + $0x30] sm:$0xff] 0.0
          %231 = vst [vmem:[#allocation2 + $0x38] sm:$0xff] 0.0
          %232 = vst [vmem:[#allocation2 + $0x40] sm:$0xff] 0.0
          %233 = vst [vmem:[#allocation2 + $0x48] sm:$0xff] 0.0
          %234 = vst [vmem:[#allocation2 + $0x50] sm:$0xff] 0.0
          %235 = vst [vmem:[#allocation2 + $0x58] sm:$0xff] 0.0
          %236 = vst [vmem:[#allocation2 + $0x60] sm:$0xff] 0.0
          %237 = vst [vmem:[#allocation2 + $0x68] sm:$0xff] 0.0
          %238 = vst [vmem:[#allocation2 + $0x70] sm:$0xff] 0.0
          %239 = vst [vmem:[#allocation2 + $0x78] sm:$0xff] 0.0
        $region40: #{tpu_custom_call.1} parent=27 // pred_fallthru
          _
        %v240 = vld [vmem:[#allocation2] sm:$0xff]
        %v241 = vld [vmem:[#allocation2 + $0x8] sm:$0xff]
        %v242 = vld [vmem:[#allocation2 + $0x10] sm:$0xff]
        %v243 = vld [vmem:[#allocation2 + $0x18] sm:$0xff]
        %v244 = vld [vmem:[#allocation2 + $0x20] sm:$0xff]
        %v245 = vld [vmem:[#allocation2 + $0x28] sm:$0xff]
        %v246 = vld [vmem:[#allocation2 + $0x30] sm:$0xff]
        %v247 = vld [vmem:[#allocation2 + $0x38] sm:$0xff]
        %v248 = vld [vmem:[#allocation2 + $0x40] sm:$0xff]
        %v249 = vld [vmem:[#allocation2 + $0x48] sm:$0xff]
        %v250 = vld [vmem:[#allocation2 + $0x50] sm:$0xff]
        %v251 = vld [vmem:[#allocation2 + $0x58] sm:$0xff]
        %v252 = vld [vmem:[#allocation2 + $0x60] sm:$0xff]
        %v253 = vld [vmem:[#allocation2 + $0x68] sm:$0xff]
        %v254 = vld [vmem:[#allocation2 + $0x70] sm:$0xff]
        %v255 = vld [vmem:[#allocation2 + $0x78] sm:$0xff]
        %v256 = vld [vmem:[#allocation3] sm:$0xf]
        %v257 = vld [vmem:[#allocation3 + $0x4] sm:$0xf]
        %v258 = vld [vmem:[#allocation3 + $0x8] sm:$0xf]
        %v259 = vld [vmem:[#allocation3 + $0xc] sm:$0xf]
        %v260 = vld [vmem:[#allocation3 + $0x10] sm:$0xf]
        %v261 = vld [vmem:[#allocation3 + $0x14] sm:$0xf]
        %v262 = vld [vmem:[#allocation3 + $0x18] sm:$0xf]
        %v263 = vld [vmem:[#allocation3 + $0x1c] sm:$0xf]
        %v264 = vld [vmem:[#allocation3 + $0x20] sm:$0xf]
        %v265 = vld [vmem:[#allocation3 + $0x24] sm:$0xf]
        %v266 = vld [vmem:[#allocation3 + $0x28] sm:$0xf]
        %v267 = vld [vmem:[#allocation3 + $0x2c] sm:$0xf]
        %v268 = vld [vmem:[#allocation3 + $0x30] sm:$0xf]
        %v269 = vld [vmem:[#allocation3 + $0x34] sm:$0xf]
        %v270 = vld [vmem:[#allocation3 + $0x38] sm:$0xf]
        %v271 = vld [vmem:[#allocation3 + $0x3c] sm:$0xf]
        %v272 = vld [vmem:[%s195] sm:$0xf]
        %v273 = vld [vmem:[%s195 + $0x4] sm:$0xf]
        %v274 = vld [vmem:[%s195 + $0x8] sm:$0xf]
        %v275 = vld [vmem:[%s195 + $0xc] sm:$0xf]
        %v276 = vld [vmem:[%s195 + $0x10] sm:$0xf]
        %v277 = vld [vmem:[%s195 + $0x14] sm:$0xf]
        %v278 = vld [vmem:[%s195 + $0x18] sm:$0xf]
        %v279 = vld [vmem:[%s195 + $0x1c] sm:$0xf]
        %v280 = vld [vmem:[%s195 + $0x20] sm:$0xf]
        %v281 = vld [vmem:[%s195 + $0x24] sm:$0xf]
        %v282 = vld [vmem:[%s195 + $0x28] sm:$0xf]
        %v283 = vld [vmem:[%s195 + $0x2c] sm:$0xf]
        %v284 = vld [vmem:[%s195 + $0x30] sm:$0xf]
        %v285 = vld [vmem:[%s195 + $0x34] sm:$0xf]
        %v286 = vld [vmem:[%s195 + $0x38] sm:$0xf]
        %v287 = vld [vmem:[%s195 + $0x3c] sm:$0xf]
        %v304 = vunpack.c.l.b16 %v256
        %v305 = vunpack.c.l.b16 %v257
        %v306 = vunpack.c.l.b16 %v258
        %v307 = vunpack.c.l.b16 %v259
        %v308 = vunpack.c.l.b16 %v260
        %v309 = vunpack.c.l.b16 %v261
        %v310 = vunpack.c.l.b16 %v262
        %v311 = vunpack.c.l.b16 %v263
        %v312 = vunpack.c.l.b16 %v264
        %v313 = vunpack.c.l.b16 %v265
        %v314 = vunpack.c.l.b16 %v266
        %v315 = vunpack.c.l.b16 %v267
        %v316 = vunpack.c.l.b16 %v268
        %v317 = vunpack.c.l.b16 %v269
        %v318 = vunpack.c.l.b16 %v270
        %v319 = vunpack.c.l.b16 %v271
        %v320 = vpack.c.b16 %v305, %v304
        %v321 = vpack.c.b16 %v307, %v306
        %v322 = vpack.c.b16 %v309, %v308
        %v323 = vpack.c.b16 %v311, %v310
        %v324 = vpack.c.b16 %v313, %v312
        %v325 = vpack.c.b16 %v315, %v314
        %v326 = vpack.c.b16 %v317, %v316
        %v327 = vpack.c.b16 %v319, %v318
        %v352 = vunpack.c.l.b16 %v272
        %v353 = vunpack.c.l.b16 %v273
        %v354 = vunpack.c.l.b16 %v274
        %v355 = vunpack.c.l.b16 %v275
        %v356 = vunpack.c.l.b16 %v276
        %v357 = vunpack.c.l.b16 %v277
        %v358 = vunpack.c.l.b16 %v278
        %v359 = vunpack.c.l.b16 %v279
        %v360 = vunpack.c.l.b16 %v280
        %v361 = vunpack.c.l.b16 %v281
        %v362 = vunpack.c.l.b16 %v282
        %v363 = vunpack.c.l.b16 %v283
        %v364 = vunpack.c.l.b16 %v284
        %v365 = vunpack.c.l.b16 %v285
        %v366 = vunpack.c.l.b16 %v286
        %v367 = vunpack.c.l.b16 %v287
        %v368 = vpack.c.b16 %v353, %v352
        %v369 = vpack.c.b16 %v355, %v354
        %v370 = vpack.c.b16 %v357, %v356
        %v371 = vpack.c.b16 %v359, %v358
        %v372 = vpack.c.b16 %v361, %v360
        %v373 = vpack.c.b16 %v363, %v362
        %v374 = vpack.c.b16 %v365, %v364
        %v375 = vpack.c.b16 %v367, %v366
        %384 = vmatpush.bf16.msra.mxu0 %v375
        %385 = vmatpush.bf16.msra.mxu0 %v374
        %386 = vmatpush.bf16.msra.mxu0 %v373
        %387 = vmatpush.bf16.msra.mxu0 %v372
        %388 = vmatpush.bf16.msra.mxu0 %v371
        %389 = vmatpush.bf16.msra.mxu0 %v370
        %390 = vmatpush.bf16.msra.mxu0 %v369
        %391 = vmatpush.bf16.msra.mxu0 %v368
        %392 = vmatmul.bf16.gmra.mxu0 %v320
        %v393 = vpop.f32.mrf.mxu0
        %v394 = vadd.f32 0.0, %v393
        %v395 = vpop.f32.mrf.mxu0
        %v396 = vadd.f32 0.0, %v395
        %397 = vmatmul.bf16.gmra.mxu0 %v321
        %v398 = vpop.f32.mrf.mxu0
        %v399 = vadd.f32 0.0, %v398
        %v400 = vpop.f32.mrf.mxu0
        %v401 = vadd.f32 0.0, %v400
        %402 = vmatmul.bf16.gmra.mxu0 %v322
        %v403 = vpop.f32.mrf.mxu0
        %v404 = vadd.f32 0.0, %v403
        %v405 = vpop.f32.mrf.mxu0
        %v406 = vadd.f32 0.0, %v405
        %407 = vmatmul.bf16.gmra.mxu0 %v323
        %v408 = vpop.f32.mrf.mxu0
        %v409 = vadd.f32 0.0, %v408
        %v410 = vpop.f32.mrf.mxu0
        %v411 = vadd.f32 0.0, %v410
        %412 = vmatmul.bf16.gmra.mxu0 %v324
        %v413 = vpop.f32.mrf.mxu0
        %v414 = vadd.f32 0.0, %v413
        %v415 = vpop.f32.mrf.mxu0
        %v416 = vadd.f32 0.0, %v415
        %417 = vmatmul.bf16.gmra.mxu0 %v325
        %v418 = vpop.f32.mrf.mxu0
        %v419 = vadd.f32 0.0, %v418
        %v420 = vpop.f32.mrf.mxu0
        %v421 = vadd.f32 0.0, %v420
        %422 = vmatmul.bf16.gmra.mxu0 %v326
        %v423 = vpop.f32.mrf.mxu0
        %v424 = vadd.f32 0.0, %v423
        %v425 = vpop.f32.mrf.mxu0
        %v426 = vadd.f32 0.0, %v425
        %427 = vmatmul.bf16.gmra.mxu0 %v327
        %v428 = vpop.f32.mrf.mxu0
        %v429 = vadd.f32 0.0, %v428
        %v430 = vpop.f32.mrf.mxu0
        %v431 = vadd.f32 0.0, %v430
        %432 = vdwg.mxu0
        %v433 = vadd.f32 %v240, %v394
        %v434 = vadd.f32 %v241, %v396
        %v435 = vadd.f32 %v242, %v399
        %v436 = vadd.f32 %v243, %v401
        %v437 = vadd.f32 %v244, %v404
        %v438 = vadd.f32 %v245, %v406
        %v439 = vadd.f32 %v246, %v409
        %v440 = vadd.f32 %v247, %v411
        %v441 = vadd.f32 %v248, %v414
        %v442 = vadd.f32 %v249, %v416
        %v443 = vadd.f32 %v250, %v419
        %v444 = vadd.f32 %v251, %v421
        %v445 = vadd.f32 %v252, %v424
        %v446 = vadd.f32 %v253, %v426
        %v447 = vadd.f32 %v254, %v429
        %v448 = vadd.f32 %v255, %v431
        %449 = vst [vmem:[#allocation2] sm:$0xff] %v433
        %450 = vst [vmem:[#allocation2 + $0x8] sm:$0xff] %v434
        %451 = vst [vmem:[#allocation2 + $0x10] sm:$0xff] %v435
        %452 = vst [vmem:[#allocation2 + $0x18] sm:$0xff] %v436
        %453 = vst [vmem:[#allocation2 + $0x20] sm:$0xff] %v437
        %454 = vst [vmem:[#allocation2 + $0x28] sm:$0xff] %v438
        %455 = vst [vmem:[#allocation2 + $0x30] sm:$0xff] %v439
        %456 = vst [vmem:[#allocation2 + $0x38] sm:$0xff] %v440
        %457 = vst [vmem:[#allocation2 + $0x40] sm:$0xff] %v441
        %458 = vst [vmem:[#allocation2 + $0x48] sm:$0xff] %v442
        %459 = vst [vmem:[#allocation2 + $0x50] sm:$0xff] %v443
        %460 = vst [vmem:[#allocation2 + $0x58] sm:$0xff] %v444
        %461 = vst [vmem:[#allocation2 + $0x60] sm:$0xff] %v445
        %462 = vst [vmem:[#allocation2 + $0x68] sm:$0xff] %v446
        %463 = vst [vmem:[#allocation2 + $0x70] sm:$0xff] %v447
        %464 = vst [vmem:[#allocation2 + $0x78] sm:$0xff] %v448
        // Predicated region
        $region41: #{tpu_custom_call.1} parent=27 // pred_check
          %p465 = pneg %p220
        $region42: #{tpu_custom_call.1} parent=27 // pred_check_branch
          %467 = sbr.rel (%p465) target = $region44
        $region43: #{tpu_custom_call.1} parent=27 // pred_region
          %v468 = vld [vmem:[#allocation2] sm:$0xff]
          %v469 = vld [vmem:[#allocation2 + $0x8] sm:$0xff]
          %v470 = vld [vmem:[#allocation2 + $0x10] sm:$0xff]
          %v471 = vld [vmem:[#allocation2 + $0x18] sm:$0xff]
          %v472 = vld [vmem:[#allocation2 + $0x20] sm:$0xff]
          %v473 = vld [vmem:[#allocation2 + $0x28] sm:$0xff]
          %v474 = vld [vmem:[#allocation2 + $0x30] sm:$0xff]
          %v475 = vld [vmem:[#allocation2 + $0x38] sm:$0xff]
          %v476 = vld [vmem:[#allocation2 + $0x40] sm:$0xff]
          %v477 = vld [vmem:[#allocation2 + $0x48] sm:$0xff]
          %v478 = vld [vmem:[#allocation2 + $0x50] sm:$0xff]
          %v479 = vld [vmem:[#allocation2 + $0x58] sm:$0xff]
          %v480 = vld [vmem:[#allocation2 + $0x60] sm:$0xff]
          %v481 = vld [vmem:[#allocation2 + $0x68] sm:$0xff]
          %v482 = vld [vmem:[#allocation2 + $0x70] sm:$0xff]
          %v483 = vld [vmem:[#allocation2 + $0x78] sm:$0xff]
          %v484 = vpack.c.bf16 %v468, %v468
          %v485 = vpack.c.bf16 %v469, %v469
          %v486 = vpack.c.bf16 %v470, %v470
          %v487 = vpack.c.bf16 %v471, %v471
          %v488 = vpack.c.bf16 %v472, %v472
          %v489 = vpack.c.bf16 %v473, %v473
          %v490 = vpack.c.bf16 %v474, %v474
          %v491 = vpack.c.bf16 %v475, %v475
          %v492 = vpack.c.bf16 %v476, %v476
          %v493 = vpack.c.bf16 %v477, %v477
          %v494 = vpack.c.bf16 %v478, %v478
          %v495 = vpack.c.bf16 %v479, %v479
          %v496 = vpack.c.bf16 %v480, %v480
          %v497 = vpack.c.bf16 %v481, %v481
          %v498 = vpack.c.bf16 %v482, %v482
          %v499 = vpack.c.bf16 %v483, %v483
          %500 = vst [vmem:[%s216] sm:$0xf] %v484
          %501 = vst [vmem:[%s216 + $0x4] sm:$0xf] %v485
          %502 = vst [vmem:[%s216 + $0x8] sm:$0xf] %v486
          %503 = vst [vmem:[%s216 + $0xc] sm:$0xf] %v487
          %504 = vst [vmem:[%s216 + $0x10] sm:$0xf] %v488
          %505 = vst [vmem:[%s216 + $0x14] sm:$0xf] %v489
          %506 = vst [vmem:[%s216 + $0x18] sm:$0xf] %v490
          %507 = vst [vmem:[%s216 + $0x1c] sm:$0xf] %v491
          %508 = vst [vmem:[%s216 + $0x20] sm:$0xf] %v492
          %509 = vst [vmem:[%s216 + $0x24] sm:$0xf] %v493
          %510 = vst [vmem:[%s216 + $0x28] sm:$0xf] %v494
          %511 = vst [vmem:[%s216 + $0x2c] sm:$0xf] %v495
          %512 = vst [vmem:[%s216 + $0x30] sm:$0xf] %v496
          %513 = vst [vmem:[%s216 + $0x34] sm:$0xf] %v497
          %514 = vst [vmem:[%s216 + $0x38] sm:$0xf] %v498
          %515 = vst [vmem:[%s216 + $0x3c] sm:$0xf] %v499
        $region44: #{tpu_custom_call.1} parent=27 // pred_fallthru
          _
        %s516 = sand.u32 %s105, 1
        %s517 = scalar_lea.sflag [#allocation5], %s516
        %s518 = sand.u32 %s105, 1
        %s519 = smul.addr %s518, 64
        %s520 = scalar_lea.vmem [#allocation8], %s519
        // Predicated region
        $region45: #{tpu_custom_call.1} parent=27 // pred_check
          %p521 = pneg %p115
        $region46: #{tpu_custom_call.1} parent=27 // pred_check_branch
          %523 = sbr.rel (%p521) target = $region48
        $region47: #{tpu_custom_call.1} parent=27 // pred_region
          %s524 = smul.u32 16, %s25
          %526 = vsyncadd %s517, 0
          %s527 = smul.addr %s26, 16
          %s528 = sadd.s32 %s524, %s527
          %s529 = smul.addr %s528, 4
          %s530 = scalar_lea.hbm %s2, %s529
          %s531 = sshll.u32 %s520, 4
          %s532 = int_to_ptr.vmem [resolvable:$true] %s531
          %s533 = sshll.u32 %s530, 4
          %s534 = int_to_ptr.hbm [resolvable:$true] %s533
          %539 = dma.vmem_to_hbm [thread:$0]  %s532, 1024, %s534, %s517, 64, 64, 4
        $region48: #{tpu_custom_call.1} parent=27 // pred_fallthru
          _
      $region28: #{tpu_custom_call.1} parent=5 // pred_fallthru
        _
      %p540 = scmp.le.s32.totalorder 2, %s15
      // Predicated region
      $region49: #{tpu_custom_call.1} parent=5 // pred_check
        %p541 = pneg %p540
      $region50: #{tpu_custom_call.1} parent=5 // pred_check_branch
        %543 = sbr.rel (%p541) target = $region52
      $region51: #{tpu_custom_call.1} parent=5 // pred_region
        %s544 = ssub.s32 %s15, 2
        // Predicated region
        $region53: #{tpu_custom_call.1} parent=51 // pred_check
          %p545 = pneg %p121
        $region54: #{tpu_custom_call.1} parent=51 // pred_check_branch
          %547 = sbr.rel (%p545) target = $region56
        $region55: #{tpu_custom_call.1} parent=51 // pred_region
          %s548 = sand.u32 %s106, 1
          %s549 = scalar_lea.sflag [#allocation5], %s548
          %s550 = sand.u32 %s106, 1
          %s551 = smul.addr %s550, 64
          %s552 = scalar_lea.vmem [#allocation8], %s551
          %554 = dma.done %s549, 1024
        $region56: #{tpu_custom_call.1} parent=51 // pred_fallthru
          _
      $region52: #{tpu_custom_call.1} parent=5 // pred_fallthru
        _
    $region6: #{tpu_custom_call.1} parent=1 // loop_footer
      %s19 = sadd.s32 1, %s15
    $region7: #{tpu_custom_call.1} parent=1 // loop_footer_branch
      %14 = sbr.rel target = $region3
    $region8: #{tpu_custom_call.1} parent=1 // loop_exit
      _
    %555 = vsyncpa [#allocation4], 1
    %s556 = scalar_lea.sflag [#allocation4], 1
    %557 = vsyncpa %s556, 1
    %558 = vsyncpa [#allocation7], 1
    %s559 = scalar_lea.sflag [#allocation7], 1
    %560 = vsyncpa %s559, 1
    %561 = vsyncpa [#allocation5], 1
    %s562 = scalar_lea.sflag [#allocation5], 1
    %563 = vsyncpa %s562, 1

</llo_original>
